<compile_context>
chip_gen: v7x
topology: tpu7x:2x2x1
jax: 0.10.0
libtpu: 0.0.40
codegen_flags: <defaults>
</compile_context>

<pallas_src>
import functools

import numpy as np
import jax
import jax.numpy as jnp
from jax.experimental import pallas as pl
from jax.experimental.pallas import tpu as pltpu


# ---------------------------------------------------------------------------
# Small static helpers
# ---------------------------------------------------------------------------
def _prod(xs):
    out = 1
    for v in xs:
        out *= int(v)
    return out


def _suffix_products(shape):
    """suf[i] = prod(shape[i:]), suf[n] = 1 (row-major strides are suf[i+1])."""
    n = len(shape)
    suf = [1] * (n + 1)
    for i in range(n - 1, -1, -1):
        suf[i] = suf[i + 1] * int(shape[i])
    return suf


# ---------------------------------------------------------------------------
# In-kernel row-pattern builders (pure data movement: broadcasts / reshapes / concats)
# ---------------------------------------------------------------------------
def _repeat_rows(x, rep):
    """(r, c) -> (r*rep, c): each row repeated `rep` times consecutively."""
    if rep == 1:
        return x
    r, c = x.shape
    if rep % 8 == 0:
        # sublane-exact: each source row expands to whole 8-sublane groups -> trivial reshape
        return jnp.broadcast_to(x[:, None, :], (r, rep, c)).reshape(r * rep, c)
    # general fallback: concatenate per-row sublane broadcasts (small r in practice)
    return jnp.concatenate(
        [jnp.broadcast_to(x[j:j + 1, :], (rep, c)) for j in range(r)], axis=0)


def _tile_rows(x, rep):
    """(r, c) -> (rep*r, c): the whole block repeated `rep` times."""
    if rep == 1:
        return x
    r, c = x.shape
    if r % 8 == 0:
        return jnp.broadcast_to(x[None, :, :], (rep, r, c)).reshape(rep * r, c)
    return jnp.concatenate([x] * rep, axis=0)


# ---------------------------------------------------------------------------
# Pallas kernel
# ---------------------------------------------------------------------------
def _pos_bias_kernel(*refs, shape, split_axis, split_k):
    """refs = (emb_0, ..., emb_{n-1}, out).  out block: (row_block, embed_dim)."""
    n_dim = len(shape)
    emb_refs = refs[:n_dim]
    o_ref = refs[n_dim]

    rb = o_ref.shape[0]                       # rows in this tile (static)
    suf = _suffix_products(shape)
    a, k = split_axis, split_k
    nb_a = shape[a] // k                      # number of split-blocks along axis a

    g = pl.program_id(0)
    # flat index over the strictly-outer axes (constant within a tile)
    o = g if nb_a == 1 else g // nb_a

    chunks = []
    for i in range(n_dim):
        e_ref = emb_refs[i]
        c_i = e_ref.shape[1]
        if i < a:
            # Index along axis i is constant inside this tile: scalar index math only,
            # one dynamic-row load, sublane broadcast. No per-element div/mod.
            stride = _prod(shape[i + 1:a])
            idx = (o // stride) % shape[i]
            row = e_ref[pl.ds(idx, 1), :]                       # (1, c_i)
            chunks.append(jnp.broadcast_to(row, (rb, c_i)))
        elif i == a:
            # k consecutive rows of the split axis; each covers prod(shape[a+1:]) rows.
            if nb_a == 1:
                blk = e_ref[...]                                # full (d_a, c_a)
            else:
                start = (g % nb_a) * k
                blk = e_ref[pl.ds(start, k), :]                 # (k, c_a)
            chunks.append(_repeat_rows(blk, suf[a + 1]))
        else:
            # Fully-inner axis: table is VMEM-resident; build its periodic pattern.
            rep = suf[i + 1]
            til = rb // (shape[i] * rep)
            chunks.append(_tile_rows(_repeat_rows(e_ref[...], rep), til))

    # Single full-width store of the (row_block, embed_dim) slab (contiguous writeback).
    o_ref[...] = jnp.concatenate(chunks, axis=-1).astype(o_ref.dtype)


# ---------------------------------------------------------------------------
# Row-tile selection
# ---------------------------------------------------------------------------
def _decompose_row_block(shape, row_block):
    """row_block = k * prod(shape[a+1:]) with k | shape[a]; return (a, k)."""
    n = len(shape)
    suf = _suffix_products(shape)
    for a in range(n - 1, -1, -1):
        inner = suf[a + 1]
        if row_block % inner == 0:
            k = row_block // inner
            if 1 <= k <= shape[a] and shape[a] % k == 0:
                return a, k
    raise ValueError(
        f"row_block={row_block} must equal k*prod(shape[a+1:]) with k dividing shape[a];"
        f" shape={shape}")


def _auto_row_block(shape, embed_dim, out_itemsize, out_buffer_budget=8 << 20):
    """Largest valid row tile whose double-buffered output block fits the VMEM budget."""
    T = _prod(shape)
    suf = _suffix_products(shape)
    cands = set()
    for a in range(len(shape)):
        for k in range(1, shape[a] + 1):
            if shape[a] % k == 0:
                cands.add(k * suf[a + 1])
    cands = sorted(cands)
    aligned = [c for c in cands if c % 8 == 0 or c == T] or cands
    max_rows = max(1, out_buffer_budget // (2 * embed_dim * out_itemsize))
    fit = [c for c in aligned if c <= max_rows] or [aligned[0]]
    best = max(fit)
    # Mild preference for >=4 grid steps (megacore sharding / DMA pipelining) when the
    # tiles stay large; never force tiny tiles for tiny T.
    if T // best < 4:
        multi = [c for c in fit if c >= 512 and T // c >= 4]
        if multi:
            best = max(multi)
    return best


# ---------------------------------------------------------------------------
# Wrapper
# ---------------------------------------------------------------------------
def broadcast_position_biases(embs, *, shape, embed_dim, decode_step=None,
                              decode_idx=None, row_block=None, out_dtype=None):
    """Returns the (prod(shape), embed_dim) positional-bias table, or a single row if
    decode_step is truthy (matching the torch module's truthiness quirk)."""
    del decode_idx                                     # unused by the torch forward
    shape = tuple(int(s) for s in shape)
    n_dim = len(shape)
    T = _prod(shape)
    chunk_sizes = tuple(int(e.shape[-1]) for e in embs)
    assert len(embs) == n_dim and sum(chunk_sizes) == embed_dim
    out_dtype = jnp.dtype(out_dtype) if out_dtype is not None else jnp.dtype(embs[0].dtype)
    suf = _suffix_products(shape)

    # Decode fast path: don't build the whole table just to slice one row.
    # Same semantics as torch: `if decode_step is not None and decode_step` -- note
    # decode_step == 0 is falsy and returns the full table (intentional parity).
    # TODO(synk): a traced (non-Python-int) decode_step is not supported, mirroring the
    # python-level truthiness check in the torch module.
    if decode_step is not None and decode_step:
        step = int(decode_step)
        rows = [embs[i][(step // suf[i + 1]) % shape[i]] for i in range(n_dim)]
        return jnp.concatenate(rows, axis=-1).astype(out_dtype)

    if row_block is None:
        row_block = _auto_row_block(shape, embed_dim, out_dtype.itemsize)
    assert T % row_block == 0, (T, row_block)
    split_axis, split_k = _decompose_row_block(shape, row_block)
    grid = (T // row_block,)

    kernel = functools.partial(_pos_bias_kernel, shape=shape,
                               split_axis=split_axis, split_k=split_k)

    # Embedding tables: full blocks, constant index_map -> DMA'd once, VMEM-resident.
    in_specs = [
        pl.BlockSpec((shape[i], chunk_sizes[i]), lambda g: (0, 0))
        for i in range(n_dim)
    ]
    out_spec = pl.BlockSpec((row_block, embed_dim), lambda g: (g, 0))

    # VMEM estimate: double-buffered output block + resident tables (+ margin).
    est_vmem = (2 * row_block * embed_dim * out_dtype.itemsize
                + 2 * sum(int(np.prod(e.shape)) * jnp.dtype(e.dtype).itemsize for e in embs)
                + (1 << 20))
    cp_kwargs = dict(dimension_semantics=("parallel",))
    if est_vmem > (16 << 20):                 # above the most conservative scoped default
        cp_kwargs["vmem_limit_bytes"] = int(min(est_vmem * 5 // 4, 60 << 20))

    return pl.pallas_call(
        kernel,
        out_shape=jax.ShapeDtypeStruct((T, embed_dim), out_dtype),
        grid=grid,
        in_specs=in_specs,
        out_specs=out_spec,
        compiler_params=pltpu.CompilerParams(**cp_kwargs),
    )(*embs)


def forward(x, embs, *, shape, embed_dim, decode_step=None, decode_idx=None,
            row_block=None, out_dtype=None):
    """Mirror of BroadcastPositionBiases.forward (x is accepted but unused, as in torch)."""
    del x
    return broadcast_position_biases(
        embs, shape=shape, embed_dim=embed_dim,
        decode_step=decode_step, decode_idx=decode_idx,
        row_block=row_block, out_dtype=out_dtype)


# ---------------------------------------------------------------------------
# Parameter init (matches the torch module: randn(shape[i], chunk_i) * 0.02)
# ---------------------------------------------------------------------------
def init_embs(key, *, shape, embed_dim):
    n_dim = len(shape)
    chunk_sizes = [embed_dim // n_dim + (1 if i < embed_dim % n_dim else 0)
                   for i in range(n_dim)]
    assert sum(chunk_sizes) == embed_dim
    keys = jax.random.split(key, n_dim)
    return [0.02 * jax.random.normal(keys[i], (shape[i], chunk_sizes[i]), jnp.float32)
            for i in range(n_dim)]


# ---------------------------------------------------------------------------
# Pure-JAX reference (mirrors the PyTorch forward) for a correctness check
# ---------------------------------------------------------------------------
def reference(embs, *, shape, embed_dim):
    n_dim = len(shape)
    out = []
    for i, e in enumerate(embs):
        view = (1,) + (1,) * i + (shape[i],) + (1,) * (n_dim - i - 1) + (e.shape[-1],)
        eb = jnp.broadcast_to(e.reshape(view), (1,) + tuple(shape) + (e.shape[-1],))
        out.append(eb)
    out = jnp.concatenate(out, axis=-1)
    return out.reshape(-1, embed_dim)


# ---------------------------------------------------------------------------
if __name__ == "__main__":
    # Module config: 3-D token grid (video-style), small shapes.
    shape = (4, 8, 8)          # T = 256 tokens
    embed_dim = 96             # chunk_sizes = [32, 32, 32]
    B = 2

    key = jax.random.PRNGKey(0)
    kx, ke = jax.random.split(key)
    embs = init_embs(ke, shape=shape, embed_dim=embed_dim)

    # x is part of the module's signature but never used by its forward.
    x = jax.random.normal(kx, (B,) + shape + (embed_dim,), jnp.float32)

    ref = reference(embs, shape=shape, embed_dim=embed_dim)
    T = int(np.prod(shape))

    # 1) default auto tiling (single large tile for this tiny T)
    out = forward(x, embs, shape=shape, embed_dim=embed_dim)
    out = jax.block_until_ready(out)
    assert out.shape == (T, embed_dim)
    np.testing.assert_allclose(np.asarray(out), np.asarray(ref), atol=1e-6, rtol=0)

    # 2) explicit tilings exercising the outer-scalar, split-axis and inner-tile paths
    for rb in (64, 32, 8):
        out_rb = broadcast_position_biases(
            embs, shape=shape, embed_dim=embed_dim, row_block=rb)
        out_rb = jax.block_until_ready(out_rb)
        np.testing.assert_allclose(np.asarray(out_rb), np.asarray(ref), atol=1e-6, rtol=0)

    # 3) decode fast path (truthy decode_step -> single row, matches table[decode_step])
    row = forward(x, embs, shape=shape, embed_dim=embed_dim, decode_step=5)
    row = jax.block_until_ready(row)
    np.testing.assert_allclose(np.asarray(row), np.asarray(ref)[5], atol=1e-6, rtol=0)

    print("KERNEL_OK")
</pallas_src>

<mosaic_0001>
module attributes {stable_mosaic.version = 11 : i64} {
  func.func @_pos_bias_kernel(%arg0: i32, %arg1: memref<4x32xf32, #tpu.memory_space<vmem>>, %arg2: memref<8x32xf32, #tpu.memory_space<vmem>>, %arg3: memref<8x32xf32, #tpu.memory_space<vmem>>, %arg4: memref<256x96xf32, #tpu.memory_space<vmem>>) attributes {dimension_semantics = [#tpu.dimension_semantics<parallel>], iteration_bounds = array<i64: 1>, scalar_prefetch = 0 : i64, scratch_operands = 0 : i64, tpu.core_type = #tpu.core_type<tc>, window_params = [{pipeline_mode = #tpu.pipeline_mode<synchronous>, transform_indices = @transform_0, window_bounds = array<i64: 4, 32>}, {pipeline_mode = #tpu.pipeline_mode<synchronous>, transform_indices = @transform_1, window_bounds = array<i64: 8, 32>}, {pipeline_mode = #tpu.pipeline_mode<synchronous>, transform_indices = @transform_2, window_bounds = array<i64: 8, 32>}, {transform_indices = @transform_3, window_bounds = array<i64: 256, 96>}]} {
    %c0 = arith.constant 0 : index
    %c0_0 = arith.constant 0 : index
    %0 = vector.load %arg1[%c0, %c0_0] : memref<4x32xf32, #tpu.memory_space<vmem>>, vector<4x32xf32>
    %1 = vector.shape_cast %0 : vector<4x32xf32> to vector<4x1x32xf32>
    %2 = vector.shape_cast %1 : vector<4x1x32xf32> to vector<4x1x32xf32>
    %3 = vector.broadcast %2 : vector<4x1x32xf32> to vector<4x64x32xf32>
    %4 = vector.shape_cast %3 : vector<4x64x32xf32> to vector<256x32xf32>
    %c0_1 = arith.constant 0 : index
    %c0_2 = arith.constant 0 : index
    %5 = vector.load %arg2[%c0_1, %c0_2] : memref<8x32xf32, #tpu.memory_space<vmem>>, vector<8x32xf32>
    %6 = vector.shape_cast %5 : vector<8x32xf32> to vector<8x1x32xf32>
    %7 = vector.shape_cast %6 : vector<8x1x32xf32> to vector<8x1x32xf32>
    %8 = vector.broadcast %7 : vector<8x1x32xf32> to vector<8x8x32xf32>
    %9 = vector.shape_cast %8 : vector<8x8x32xf32> to vector<64x32xf32>
    %10 = vector.shape_cast %9 : vector<64x32xf32> to vector<1x64x32xf32>
    %11 = vector.shape_cast %10 : vector<1x64x32xf32> to vector<1x64x32xf32>
    %12 = vector.broadcast %11 : vector<1x64x32xf32> to vector<4x64x32xf32>
    %13 = vector.shape_cast %12 : vector<4x64x32xf32> to vector<256x32xf32>
    %c0_3 = arith.constant 0 : index
    %c0_4 = arith.constant 0 : index
    %14 = vector.load %arg3[%c0_3, %c0_4] : memref<8x32xf32, #tpu.memory_space<vmem>>, vector<8x32xf32>
    %15 = vector.shape_cast %14 : vector<8x32xf32> to vector<1x8x32xf32>
    %16 = vector.shape_cast %15 : vector<1x8x32xf32> to vector<1x8x32xf32>
    %17 = vector.broadcast %16 : vector<1x8x32xf32> to vector<32x8x32xf32>
    %18 = vector.shape_cast %17 : vector<32x8x32xf32> to vector<256x32xf32>
    %19 = tpu.concatenate %4, %13, %18 in 1 : vector<256x32xf32>, vector<256x32xf32>, vector<256x32xf32> -> vector<256x96xf32>
    %c0_5 = arith.constant 0 : index
    %c0_6 = arith.constant 0 : index
    %20 = vector.load %arg4[%c0_5, %c0_6] : memref<256x96xf32, #tpu.memory_space<vmem>>, vector<256x96xf32>
    tpu.vector_store %arg4[%c0_5, %c0_6], %19 {strides = array<i32>} : memref<256x96xf32, #tpu.memory_space<vmem>>, vector<256x96xf32>,
    return
  }
  func.func @transform_0(%arg0: i32) -> (i32, i32) {
    %c0_i32 = arith.constant 0 : i32
    %c0_i32_0 = arith.constant 0 : i32
    %c0_i32_1 = arith.constant 0 : i32
    return %c0_i32, %c0_i32_0 : i32, i32
  }
  func.func @transform_1(%arg0: i32) -> (i32, i32) {
    %c0_i32 = arith.constant 0 : i32
    %c0_i32_0 = arith.constant 0 : i32
    %c0_i32_1 = arith.constant 0 : i32
    return %c0_i32, %c0_i32_0 : i32, i32
  }
  func.func @transform_2(%arg0: i32) -> (i32, i32) {
    %c0_i32 = arith.constant 0 : i32
    %c0_i32_0 = arith.constant 0 : i32
    %c0_i32_1 = arith.constant 0 : i32
    return %c0_i32, %c0_i32_0 : i32, i32
  }
  func.func @transform_3(%arg0: i32) -> (i32, i32) {
    %c0_i32 = arith.constant 0 : i32
    %c0_i32_0 = arith.constant 0 : i32
    return %arg0, %c0_i32 : i32, i32
  }
}

</mosaic_0001>

<llo_original>
// kernel: tpu_custom_call.1
$region0: #{tpu_custom_call.1}
  #allocation0 [shape = 'u32[]', space=smem, size = 0x4, offset = 0x4, fixed_abs, tag = 'smem constant byte address 0x4 - core index']
  #allocation1 [shape = 'u32[144,128]{1,0:T(1,128)}', space=vmem, size = 0x12000, scoped, tag = 'internal scratch']
  %s0 = inlined_call_operand.hbm [shape: f32[4,32], index: 0, kind: input, shape index: {}]
  %s1 = inlined_call_operand.hbm [shape: f32[8,32], index: 1, kind: input, shape index: {}]
  %s2 = inlined_call_operand.hbm [shape: f32[8,32], index: 2, kind: input, shape index: {}]
  %s3 = inlined_call_operand.vmem [shape: f32[256,96], index: 3, kind: output, shape index: {}]
  %s4 = sld [smem:[#allocation0]]
  $region34: #{tpu_custom_call.1} parent=0
    _
  %s6 = ssub.s32 1, %s4
  %s7 = scalar_select 0, %s6, %s4
  $region1: #{tpu_custom_call.1} parent=0
    #allocation2 [shape = 'u8[2048]{0}', space=vmem, size = 0x800, scoped, tag = 'input window, operand 0, single buffered']
    #allocation3 [shape = 's32[1]{0}', space=sflag, size = 0x4, scoped, tag = 'scoped memory for tpu_custom_call.1']
    #allocation4 [shape = 'u8[4096]{0}', space=vmem, size = 0x1000, scoped, tag = 'input window, operand 1, single buffered']
    #allocation5 [shape = 's32[1]{0}', space=sflag, size = 0x4, scoped, tag = 'scoped memory for tpu_custom_call.1']
    #allocation6 [shape = 'u8[4096]{0}', space=vmem, size = 0x1000, scoped, tag = 'input window, operand 2, single buffered']
    %8 = vsyncpa [#allocation3], 0
    %9 = vsyncpa [#allocation5], 0
    // Predicated region
    $region2: #{tpu_custom_call.1} parent=1 // pred_check
      _
    $region3: #{tpu_custom_call.1} parent=1 // pred_check_branch
      %11 = sbr.rel (0) target = $region5
    $region4: #{tpu_custom_call.1} parent=1 // pred_region
      %s13 = ssub.s32 64, 64
      %14 = vsyncadd [#allocation3], %s13
      %s16 = sshll.u32 [#allocation2], 4
      %s17 = int_to_ptr.vmem [resolvable:$true] %s16
      %19 = dma.hbm_to_vmem [thread:$0]  %s0, 64, %s17, [#allocation3]
    $region5: #{tpu_custom_call.1} parent=1 // pred_fallthru
      _
    // Predicated region
    $region6: #{tpu_custom_call.1} parent=1 // pred_check
      _
    $region7: #{tpu_custom_call.1} parent=1 // pred_check_branch
      %21 = sbr.rel (0) target = $region9
    $region8: #{tpu_custom_call.1} parent=1 // pred_region
      %s23 = ssub.s32 128, 128
      %24 = vsyncadd [#allocation5], %s23
      %s26 = sshll.u32 [#allocation4], 4
      %s27 = int_to_ptr.vmem [resolvable:$true] %s26
      %29 = dma.hbm_to_vmem [thread:$0]  %s1, 128, %s27, [#allocation5]
    $region9: #{tpu_custom_call.1} parent=1 // pred_fallthru
      _
    // Predicated region
    $region10: #{tpu_custom_call.1} parent=1 // pred_check
      _
    $region11: #{tpu_custom_call.1} parent=1 // pred_check_branch
      %31 = sbr.rel (0) target = $region13
    $region12: #{tpu_custom_call.1} parent=1 // pred_region
      %s33 = ssub.s32 128, 128
      %34 = vsyncadd [#allocation5], %s33
      %s36 = sshll.u32 [#allocation6], 4
      %s37 = int_to_ptr.vmem [resolvable:$true] %s36
      %39 = dma.hbm_to_vmem [thread:$0]  %s2, 128, %s37, [#allocation5]
    $region13: #{tpu_custom_call.1} parent=1 // pred_fallthru
      _
    // Predicated region
    $region14: #{tpu_custom_call.1} parent=1 // pred_check
      _
    $region15: #{tpu_custom_call.1} parent=1 // pred_check_branch
      %41 = sbr.rel (0) target = $region17
    $region16: #{tpu_custom_call.1} parent=1 // pred_region
      %42 = dma.done [#allocation3], 64
    $region17: #{tpu_custom_call.1} parent=1 // pred_fallthru
      _
    // Predicated region
    $region18: #{tpu_custom_call.1} parent=1 // pred_check
      _
    $region19: #{tpu_custom_call.1} parent=1 // pred_check_branch
      %44 = sbr.rel (0) target = $region21
    $region20: #{tpu_custom_call.1} parent=1 // pred_region
      %45 = dma.done [#allocation5], 128
    $region21: #{tpu_custom_call.1} parent=1 // pred_fallthru
      _
    // Predicated region
    $region22: #{tpu_custom_call.1} parent=1 // pred_check
      _
    $region23: #{tpu_custom_call.1} parent=1 // pred_check_branch
      %47 = sbr.rel (0) target = $region25
    $region24: #{tpu_custom_call.1} parent=1 // pred_region
      %48 = dma.done [#allocation5], 128
    $region25: #{tpu_custom_call.1} parent=1 // pred_fallthru
      _
    %v49 = vld [vmem:[#allocation2] sm:$0xf]
    %v52 = vunpack.c.l.s4 1966171168
    %v53 = vunpack.c.0.s8 %v52
    %v54 = vlaneseq
    %v55 = vshrl.u32 %v54, 7
    %v56 = vsub.s32 %v53, %v55
    %v57 = vrot.slane %v49, %v56
    %v58 = vcombine.high %v57, %v57
    %v60 = vunpack.c.l.s4 1966171168
    %v61 = vunpack.c.0.s8 %v60
    %v62 = vlaneseq
    %v63 = vshrl.u32 %v62, 7
    %v64 = vsub.s32 %v61, %v63
    %v65 = vrot.slane %v57, %v64
    %v67 = vunpack.c.l.s4 1966171168
    %v68 = vunpack.c.0.s8 %v67
    %v69 = vlaneseq
    %v70 = vshrl.u32 %v69, 7
    %v71 = vsub.s32 %v68, %v70
    %v72 = vrot.slane %v58, %v71
    %v73 = vcombine.high %v65, %v65
    %v74 = vcombine.high %v72, %v72
    %v75 = vlaneseq
    %v76 = vshrl.u32 %v75, 7
    %v77 = vsub.s32 0, %v76
    %v78 = vrot.slane %v65, %v77
    %v79 = vlaneseq
    %v80 = vshrl.u32 %v79, 7
    %v81 = vsub.s32 0, %v80
    %v82 = vrot.slane %v72, %v81
    %v83 = vlaneseq
    %v84 = vshrl.u32 %v83, 7
    %v85 = vsub.s32 0, %v84
    %v86 = vrot.slane %v73, %v85
    %v87 = vlaneseq
    %v88 = vshrl.u32 %v87, 7
    %v89 = vsub.s32 0, %v88
    %v90 = vrot.slane %v74, %v89
    %v95 = vld [vmem:[#allocation4] sm:$0xff]
    %v97 = vcombine.high %v95, %v95
    %v99 = vunpack.c.l.s4 1966171168
    %v100 = vunpack.c.0.s8 %v99
    %v101 = vlaneseq
    %v102 = vshrl.u32 %v101, 7
    %v103 = vsub.s32 %v100, %v102
    %v104 = vrot.slane %v95, %v103
    %v106 = vunpack.c.l.s4 1966171168
    %v107 = vunpack.c.0.s8 %v106
    %v108 = vlaneseq
    %v109 = vshrl.u32 %v108, 7
    %v110 = vsub.s32 %v107, %v109
    %v111 = vrot.slane %v97, %v110
    %v112 = vcombine.high %v104, %v104
    %v113 = vcombine.high %v111, %v111
    %v115 = vunpack.c.l.s4 1966171168
    %v116 = vunpack.c.0.s8 %v115
    %v117 = vlaneseq
    %v118 = vshrl.u32 %v117, 7
    %v119 = vsub.s32 %v116, %v118
    %v120 = vrot.slane %v104, %v119
    %v122 = vunpack.c.l.s4 1966171168
    %v123 = vunpack.c.0.s8 %v122
    %v124 = vlaneseq
    %v125 = vshrl.u32 %v124, 7
    %v126 = vsub.s32 %v123, %v125
    %v127 = vrot.slane %v111, %v126
    %v129 = vunpack.c.l.s4 1966171168
    %v130 = vunpack.c.0.s8 %v129
    %v131 = vlaneseq
    %v132 = vshrl.u32 %v131, 7
    %v133 = vsub.s32 %v130, %v132
    %v134 = vrot.slane %v112, %v133
    %v136 = vunpack.c.l.s4 1966171168
    %v137 = vunpack.c.0.s8 %v136
    %v138 = vlaneseq
    %v139 = vshrl.u32 %v138, 7
    %v140 = vsub.s32 %v137, %v139
    %v141 = vrot.slane %v113, %v140
    %v142 = vcombine.high %v120, %v120
    %v143 = vcombine.high %v127, %v127
    %v144 = vcombine.high %v134, %v134
    %v145 = vcombine.high %v141, %v141
    %v146 = vlaneseq
    %v147 = vshrl.u32 %v146, 7
    %v148 = vsub.s32 0, %v147
    %v149 = vrot.slane %v120, %v148
    %v150 = vlaneseq
    %v151 = vshrl.u32 %v150, 7
    %v152 = vsub.s32 0, %v151
    %v153 = vrot.slane %v134, %v152
    %v154 = vlaneseq
    %v155 = vshrl.u32 %v154, 7
    %v156 = vsub.s32 0, %v155
    %v157 = vrot.slane %v142, %v156
    %v158 = vlaneseq
    %v159 = vshrl.u32 %v158, 7
    %v160 = vsub.s32 0, %v159
    %v161 = vrot.slane %v144, %v160
    %v162 = vlaneseq
    %v163 = vshrl.u32 %v162, 7
    %v164 = vsub.s32 0, %v163
    %v165 = vrot.slane %v127, %v164
    %v166 = vlaneseq
    %v167 = vshrl.u32 %v166, 7
    %v168 = vsub.s32 0, %v167
    %v169 = vrot.slane %v141, %v168
    %v170 = vlaneseq
    %v171 = vshrl.u32 %v170, 7
    %v172 = vsub.s32 0, %v171
    %v173 = vrot.slane %v143, %v172
    %v174 = vlaneseq
    %v175 = vshrl.u32 %v174, 7
    %v176 = vsub.s32 0, %v175
    %v177 = vrot.slane %v145, %v176
    %v178 = vld [vmem:[#allocation6] sm:$0xff]
    %179 = vrot.lane.b32.xlu0 %v149, 32
    %v180 = vpop.permute.xlu0 %179
    %181 = vrot.lane.b32.xlu0 %v153, 32
    %v182 = vpop.permute.xlu0 %181
    %183 = vrot.lane.b32.xlu0 %v157, 32
    %v184 = vpop.permute.xlu0 %183
    %185 = vrot.lane.b32.xlu0 %v161, 32
    %v186 = vpop.permute.xlu0 %185
    %187 = vrot.lane.b32.xlu0 %v165, 32
    %v188 = vpop.permute.xlu0 %187
    %189 = vrot.lane.b32.xlu0 %v169, 32
    %v190 = vpop.permute.xlu0 %189
    %191 = vrot.lane.b32.xlu0 %v173, 32
    %v192 = vpop.permute.xlu0 %191
    %193 = vrot.lane.b32.xlu0 %v177, 32
    %v194 = vpop.permute.xlu0 %193
    %204 = vrot.lane.b32.xlu0 %v178, 64
    %v205 = vpop.permute.xlu0 %204
    %vm207 = vcmask 261120
    %v208 = vsel %vm207, %v78, %v180
    %v209 = vsel %vm207, %v78, %v182
    %v210 = vsel %vm207, %v78, %v184
    %v211 = vsel %vm207, %v78, %v186
    %v212 = vsel %vm207, %v78, %v188
    %v213 = vsel %vm207, %v78, %v190
    %v214 = vsel %vm207, %v78, %v192
    %v215 = vsel %vm207, %v78, %v194
    %v216 = vsel %vm207, %v82, %v180
    %v217 = vsel %vm207, %v82, %v182
    %v218 = vsel %vm207, %v82, %v184
    %v219 = vsel %vm207, %v82, %v186
    %v220 = vsel %vm207, %v82, %v188
    %v221 = vsel %vm207, %v82, %v190
    %v222 = vsel %vm207, %v82, %v192
    %v223 = vsel %vm207, %v82, %v194
    %v224 = vsel %vm207, %v86, %v180
    %v225 = vsel %vm207, %v86, %v182
    %v226 = vsel %vm207, %v86, %v184
    %v227 = vsel %vm207, %v86, %v186
    %v228 = vsel %vm207, %v86, %v188
    %v229 = vsel %vm207, %v86, %v190
    %v230 = vsel %vm207, %v86, %v192
    %v231 = vsel %vm207, %v86, %v194
    %v232 = vsel %vm207, %v90, %v180
    %v233 = vsel %vm207, %v90, %v182
    %v234 = vsel %vm207, %v90, %v184
    %v235 = vsel %vm207, %v90, %v186
    %v236 = vsel %vm207, %v90, %v188
    %v237 = vsel %vm207, %v90, %v190
    %v238 = vsel %vm207, %v90, %v192
    %v239 = vsel %vm207, %v90, %v194
    %vm240 = vcmask 523264
    %v241 = vsel %vm240, %v208, %v205
    %v242 = vsel %vm240, %v209, %v205
    %v243 = vsel %vm240, %v210, %v205
    %v244 = vsel %vm240, %v211, %v205
    %v245 = vsel %vm240, %v212, %v205
    %v246 = vsel %vm240, %v213, %v205
    %v247 = vsel %vm240, %v214, %v205
    %v248 = vsel %vm240, %v215, %v205
    %v249 = vsel %vm240, %v216, %v205
    %v250 = vsel %vm240, %v217, %v205
    %v251 = vsel %vm240, %v218, %v205
    %v252 = vsel %vm240, %v219, %v205
    %v253 = vsel %vm240, %v220, %v205
    %v254 = vsel %vm240, %v221, %v205
    %v255 = vsel %vm240, %v222, %v205
    %v256 = vsel %vm240, %v223, %v205
    %v257 = vsel %vm240, %v224, %v205
    %v258 = vsel %vm240, %v225, %v205
    %v259 = vsel %vm240, %v226, %v205
    %v260 = vsel %vm240, %v227, %v205
    %v261 = vsel %vm240, %v228, %v205
    %v262 = vsel %vm240, %v229, %v205
    %v263 = vsel %vm240, %v230, %v205
    %v264 = vsel %vm240, %v231, %v205
    %v265 = vsel %vm240, %v232, %v205
    %v266 = vsel %vm240, %v233, %v205
    %v267 = vsel %vm240, %v234, %v205
    %v268 = vsel %vm240, %v235, %v205
    %v269 = vsel %vm240, %v236, %v205
    %v270 = vsel %vm240, %v237, %v205
    %v271 = vsel %vm240, %v238, %v205
    %v272 = vsel %vm240, %v239, %v205
    %vm273 = vcmask 785408
    %274 = vst.msk [vmem:[%s3] sm:$0xff] %vm273, %v241
    %275 = vst.msk [vmem:[%s3 + $0x8] sm:$0xff] %vm273, %v242
    %276 = vst.msk [vmem:[%s3 + $0x10] sm:$0xff] %vm273, %v243
    %277 = vst.msk [vmem:[%s3 + $0x18] sm:$0xff] %vm273, %v244
    %278 = vst.msk [vmem:[%s3 + $0x20] sm:$0xff] %vm273, %v245
    %279 = vst.msk [vmem:[%s3 + $0x28] sm:$0xff] %vm273, %v246
    %280 = vst.msk [vmem:[%s3 + $0x30] sm:$0xff] %vm273, %v247
    %281 = vst.msk [vmem:[%s3 + $0x38] sm:$0xff] %vm273, %v248
    %282 = vst.msk [vmem:[%s3 + $0x40] sm:$0xff] %vm273, %v249
    %283 = vst.msk [vmem:[%s3 + $0x48] sm:$0xff] %vm273, %v250
    %284 = vst.msk [vmem:[%s3 + $0x50] sm:$0xff] %vm273, %v251
    %285 = vst.msk [vmem:[%s3 + $0x58] sm:$0xff] %vm273, %v252
    %286 = vst.msk [vmem:[%s3 + $0x60] sm:$0xff] %vm273, %v253
    %287 = vst.msk [vmem:[%s3 + $0x68] sm:$0xff] %vm273, %v254
    %288 = vst.msk [vmem:[%s3 + $0x70] sm:$0xff] %vm273, %v255
    %289 = vst.msk [vmem:[%s3 + $0x78] sm:$0xff] %vm273, %v256
    %290 = vst.msk [vmem:[%s3 + $0x80] sm:$0xff] %vm273, %v257
    %291 = vst.msk [vmem:[%s3 + $0x88] sm:$0xff] %vm273, %v258
    %292 = vst.msk [vmem:[%s3 + $0x90] sm:$0xff] %vm273, %v259
    %293 = vst.msk [vmem:[%s3 + $0x98] sm:$0xff] %vm273, %v260
    %294 = vst.msk [vmem:[%s3 + $0xa0] sm:$0xff] %vm273, %v261
    %295 = vst.msk [vmem:[%s3 + $0xa8] sm:$0xff] %vm273, %v262
    %296 = vst.msk [vmem:[%s3 + $0xb0] sm:$0xff] %vm273, %v263
    %297 = vst.msk [vmem:[%s3 + $0xb8] sm:$0xff] %vm273, %v264
    %298 = vst.msk [vmem:[%s3 + $0xc0] sm:$0xff] %vm273, %v265
    %299 = vst.msk [vmem:[%s3 + $0xc8] sm:$0xff] %vm273, %v266
    %300 = vst.msk [vmem:[%s3 + $0xd0] sm:$0xff] %vm273, %v267
    %301 = vst.msk [vmem:[%s3 + $0xd8] sm:$0xff] %vm273, %v268
    %302 = vst.msk [vmem:[%s3 + $0xe0] sm:$0xff] %vm273, %v269
    %303 = vst.msk [vmem:[%s3 + $0xe8] sm:$0xff] %vm273, %v270
    %304 = vst.msk [vmem:[%s3 + $0xf0] sm:$0xff] %vm273, %v271
    %305 = vst.msk [vmem:[%s3 + $0xf8] sm:$0xff] %vm273, %v272
    // Predicated region
    $region26: #{tpu_custom_call.1} parent=1 // pred_check
      _
    $region27: #{tpu_custom_call.1} parent=1 // pred_check_branch
      %307 = sbr.rel (0) target = $region29
    $region28: #{tpu_custom_call.1} parent=1 // pred_region
      _
    $region29: #{tpu_custom_call.1} parent=1 // pred_fallthru
      _
    // Predicated region
    $region30: #{tpu_custom_call.1} parent=1 // pred_check
      _
    $region31: #{tpu_custom_call.1} parent=1 // pred_check_branch
      %309 = sbr.rel (0) target = $region33
    $region32: #{tpu_custom_call.1} parent=1 // pred_region
      _
    $region33: #{tpu_custom_call.1} parent=1 // pred_fallthru
      _
    %310 = vsyncpa [#allocation3], 1
    %311 = vsyncpa [#allocation5], 1

</llo_original>
